<compile_context>
chip_gen: v5e
topology: v5e:2x2
jax: 0.10.0
libtpu: 0.0.40
codegen_flags: <defaults>
</compile_context>

<pallas_src>
import functools

import jax
import jax.numpy as jnp
from jax.experimental import pallas as pl
from jax.experimental.pallas import tpu as pltpu


def _fold_groups_sum(row, C):
    """Sum `row` (..., W*C) over its W contiguous lane-groups of width C -> (..., C)."""
    groups = row.shape[-1] // C
    # Tree-fold halves while the group count is even: log2(W) adds, mostly
    # 128-aligned lane splits.
    while groups > 1 and groups % 2 == 0:
        half = (groups // 2) * C
        row = row[..., :half] + row[..., half:]
        groups //= 2
    # Linear fold for any odd remainder (W not a power of two).
    out = row[..., :C]
    for g in range(1, groups):
        out = out + row[..., g * C:(g + 1) * C]
    return out


def _ca_layer_kernel(x_ref, w1_ref, w2_ref, o_ref, *, H, W, C):
    # x_ref: (bb, H, W*C) lane-dense activation block (bb whole batch elements).
    x = x_ref[...].astype(jnp.float32)                       # (bb, H, W*C)

    # ---- AdaptiveAvgPool2d(1): per-channel mean over H*W ----------------------
    col = jnp.sum(x, axis=1)                                  # (bb, W*C) sublane reduce
    pooled = _fold_groups_sum(col, C) * (1.0 / (H * W))       # (bb, C)

    # ---- conv_du: 1x1 conv -> ReLU -> 1x1 conv -> Sigmoid (tiny M=bb matmuls) -
    z = jnp.maximum(
        jnp.dot(pooled, w1_ref[...], preferred_element_type=jnp.float32), 0.0)
    gate = jax.nn.sigmoid(
        jnp.dot(z, w2_ref[...], preferred_element_type=jnp.float32))      # (bb, C)

    # ---- out = x * y: replicate gate across the W lane-groups, bcast over H ---
    gate_wc = jnp.tile(gate, (1, W))                          # (bb, W*C)
    o_ref[...] = (x * gate_wc[:, None, :]).astype(o_ref.dtype)


def ca_layer(x, w1, w2):
    """Channel attention.  x: (B, H, W, C) NHWC; w1: (C, Cr); w2: (Cr, C)."""
    B, H, W, C = x.shape
    Cr = w1.shape[-1]
    WC = W * C
    x_flat = x.reshape(B, H, WC)                              # contiguous, lane-dense view

    # Batch-block size: as many whole batch elements per grid step as fit a modest
    # VMEM budget (input + output slabs, double-buffered), and that divide B exactly
    # (no padded partial blocks).
    bytes_per_batch = H * WC * x.dtype.itemsize
    budget = 8 * 1024 * 1024
    bb = max(1, min(B, budget // max(1, bytes_per_batch)))
    while B % bb:
        bb -= 1

    kernel = functools.partial(_ca_layer_kernel, H=H, W=W, C=C)
    out = pl.pallas_call(
        kernel,
        out_shape=jax.ShapeDtypeStruct((B, H, WC), x.dtype),
        grid=(B // bb,),
        in_specs=[
            pl.BlockSpec((bb, H, WC), lambda b: (b, 0, 0)),
            pl.BlockSpec((C, Cr), lambda b: (0, 0)),          # weights stay resident
            pl.BlockSpec((Cr, C), lambda b: (0, 0)),
        ],
        out_specs=pl.BlockSpec((bb, H, WC), lambda b: (b, 0, 0)),
        compiler_params=pltpu.CompilerParams(
            dimension_semantics=("parallel",)),               # v7x: batch blocks split across TCs
    )(x_flat, w1, w2)
    return out.reshape(B, H, W, C)


if __name__ == "__main__":
    # Small test shapes consistent with the module: channel must be >= reduction (=16).
    B, C, H, W = 2, 64, 16, 16
    reduction = 16
    Cr = C // reduction

    key = jax.random.PRNGKey(0)
    kx, k1, k2 = jax.random.split(key, 3)
    x = jax.random.normal(kx, (B, H, W, C), jnp.float32)            # NHWC activation
    w1 = jax.random.normal(k1, (C, Cr), jnp.float32) * 0.1          # conv_du[0] weight (transposed)
    w2 = jax.random.normal(k2, (Cr, C), jnp.float32) * 0.1          # conv_du[2] weight (transposed)

    out = jax.jit(ca_layer)(x, w1, w2)
    jax.block_until_ready(out)

    # Pure-JAX reference (== PyTorch CALayer.forward, in NHWC).
    pooled = x.mean(axis=(1, 2))                                     # AdaptiveAvgPool2d(1)
    gate = jax.nn.sigmoid(jnp.maximum(pooled @ w1, 0.0) @ w2)        # (B, C)
    ref = x * gate[:, None, None, :]

    assert out.shape == (B, H, W, C)
    assert bool(jnp.all(jnp.isfinite(out)))
    assert jnp.allclose(out, ref, atol=1e-5, rtol=1e-5)
    print("KERNEL_OK")
</pallas_src>

<mosaic_0001>
module attributes {stable_mosaic.version = 11 : i64} {
  func.func @_ca_layer_kernel(%arg0: i32, %arg1: memref<2x16x1024xf32, #tpu.memory_space<vmem>>, %arg2: memref<64x4xf32, #tpu.memory_space<vmem>>, %arg3: memref<4x64xf32, #tpu.memory_space<vmem>>, %arg4: memref<2x16x1024xf32, #tpu.memory_space<vmem>>) attributes {dimension_semantics = [#tpu.dimension_semantics<parallel>], iteration_bounds = array<i64: 1>, scalar_prefetch = 0 : i64, scratch_operands = 0 : i64, tpu.core_type = #tpu.core_type<tc>, window_params = [{transform_indices = @transform_0, window_bounds = array<i64: 2, 16, 1024>}, {pipeline_mode = #tpu.pipeline_mode<synchronous>, transform_indices = @transform_1, window_bounds = array<i64: 64, 4>}, {pipeline_mode = #tpu.pipeline_mode<synchronous>, transform_indices = @transform_2, window_bounds = array<i64: 4, 64>}, {transform_indices = @transform_3, window_bounds = array<i64: 2, 16, 1024>}]} {
    %c0 = arith.constant 0 : index
    %c0_0 = arith.constant 0 : index
    %c0_1 = arith.constant 0 : index
    %0 = vector.load %arg1[%c0, %c0_0, %c0_1] : memref<2x16x1024xf32, #tpu.memory_space<vmem>>, vector<2x16x1024xf32>
    %cst = arith.constant dense<0.000000e+00> : vector<2x1024xf32>
    %1 = vector.multi_reduction <add>, %0, %cst [1] : vector<2x16x1024xf32> to vector<2x1024xf32>
    %2 = vector.extract_strided_slice %1 {offsets = [0, 0], sizes = [2, 512], strides = [1, 1]} : vector<2x1024xf32> to vector<2x512xf32>
    %3 = vector.extract_strided_slice %1 {offsets = [0, 512], sizes = [2, 512], strides = [1, 1]} : vector<2x1024xf32> to vector<2x512xf32>
    %4 = arith.addf %2, %3 : vector<2x512xf32>
    %5 = vector.extract_strided_slice %4 {offsets = [0, 0], sizes = [2, 256], strides = [1, 1]} : vector<2x512xf32> to vector<2x256xf32>
    %6 = vector.extract_strided_slice %4 {offsets = [0, 256], sizes = [2, 256], strides = [1, 1]} : vector<2x512xf32> to vector<2x256xf32>
    %7 = arith.addf %5, %6 : vector<2x256xf32>
    %8 = vector.extract_strided_slice %7 {offsets = [0, 0], sizes = [2, 128], strides = [1, 1]} : vector<2x256xf32> to vector<2x128xf32>
    %9 = vector.extract_strided_slice %7 {offsets = [0, 128], sizes = [2, 128], strides = [1, 1]} : vector<2x256xf32> to vector<2x128xf32>
    %10 = arith.addf %8, %9 : vector<2x128xf32>
    %11 = vector.extract_strided_slice %10 {offsets = [0, 0], sizes = [2, 64], strides = [1, 1]} : vector<2x128xf32> to vector<2x64xf32>
    %12 = vector.extract_strided_slice %10 {offsets = [0, 64], sizes = [2, 64], strides = [1, 1]} : vector<2x128xf32> to vector<2x64xf32>
    %13 = arith.addf %11, %12 : vector<2x64xf32>
    %cst_2 = arith.constant 3.906250e-03 : f32
    %14 = vector.broadcast %cst_2 : f32 to vector<2x64xf32>
    %15 = arith.mulf %13, %14 : vector<2x64xf32>
    %c0_3 = arith.constant 0 : index
    %c0_4 = arith.constant 0 : index
    %16 = vector.load %arg2[%c0_3, %c0_4] : memref<64x4xf32, #tpu.memory_space<vmem>>, vector<64x4xf32>
    %cst_5 = arith.constant dense<0.000000e+00> : vector<2x4xf32>
    %17 = tpu.matmul %15, %16, %cst_5 {dimension_numbers = #tpu.dot_dimension_numbers<[1], [0], [0], [1], [0, 0, 1, 1], [], []>} : vector<2x64xf32>, vector<64x4xf32>, vector<2x4xf32> -> vector<2x4xf32>
    %cst_6 = arith.constant 0.000000e+00 : f32
    %18 = vector.broadcast %cst_6 : f32 to vector<2x4xf32>
    %19 = arith.maximumf %17, %18 : vector<2x4xf32>
    %c0_7 = arith.constant 0 : index
    %c0_8 = arith.constant 0 : index
    %20 = vector.load %arg3[%c0_7, %c0_8] : memref<4x64xf32, #tpu.memory_space<vmem>>, vector<4x64xf32>
    %cst_9 = arith.constant dense<0.000000e+00> : vector<2x64xf32>
    %21 = tpu.matmul %19, %20, %cst_9 {dimension_numbers = #tpu.dot_dimension_numbers<[1], [0], [0], [1], [0, 0, 1, 1], [], []>} : vector<2x4xf32>, vector<4x64xf32>, vector<2x64xf32> -> vector<2x64xf32>
    %22 = arith.negf %21 : vector<2x64xf32>
    %23 = math.exp %22 : vector<2x64xf32>
    %cst_10 = arith.constant 1.000000e+00 : f32
    %24 = vector.broadcast %cst_10 : f32 to vector<2x64xf32>
    %25 = arith.addf %24, %23 : vector<2x64xf32>
    %26 = arith.divf %24, %25 : vector<2x64xf32>
    %27 = tpu.concatenate %26, %26, %26, %26, %26, %26, %26, %26, %26, %26, %26, %26, %26, %26, %26, %26 in 1 : vector<2x64xf32>, vector<2x64xf32>, vector<2x64xf32>, vector<2x64xf32>, vector<2x64xf32>, vector<2x64xf32>, vector<2x64xf32>, vector<2x64xf32>, vector<2x64xf32>, vector<2x64xf32>, vector<2x64xf32>, vector<2x64xf32>, vector<2x64xf32>, vector<2x64xf32>, vector<2x64xf32>, vector<2x64xf32> -> vector<2x1024xf32>
    %28 = vector.shape_cast %27 : vector<2x1024xf32> to vector<2x1x1024xf32>
    %29 = vector.broadcast %28 : vector<2x1x1024xf32> to vector<2x16x1024xf32>
    %30 = arith.mulf %0, %29 : vector<2x16x1024xf32>
    %c0_11 = arith.constant 0 : index
    %c0_12 = arith.constant 0 : index
    %c0_13 = arith.constant 0 : index
    %31 = vector.load %arg4[%c0_11, %c0_12, %c0_13] : memref<2x16x1024xf32, #tpu.memory_space<vmem>>, vector<2x16x1024xf32>
    tpu.vector_store %arg4[%c0_11, %c0_12, %c0_13], %30 {strides = array<i32>} : memref<2x16x1024xf32, #tpu.memory_space<vmem>>, vector<2x16x1024xf32>,
    return
  }
  func.func @transform_0(%arg0: i32) -> (i32, i32, i32) {
    %c0_i32 = arith.constant 0 : i32
    %c0_i32_0 = arith.constant 0 : i32
    %c0_i32_1 = arith.constant 0 : i32
    return %arg0, %c0_i32, %c0_i32_0 : i32, i32, i32
  }
  func.func @transform_1(%arg0: i32) -> (i32, i32) {
    %c0_i32 = arith.constant 0 : i32
    %c0_i32_0 = arith.constant 0 : i32
    %c0_i32_1 = arith.constant 0 : i32
    return %c0_i32, %c0_i32_0 : i32, i32
  }
  func.func @transform_2(%arg0: i32) -> (i32, i32) {
    %c0_i32 = arith.constant 0 : i32
    %c0_i32_0 = arith.constant 0 : i32
    %c0_i32_1 = arith.constant 0 : i32
    return %c0_i32, %c0_i32_0 : i32, i32
  }
  func.func @transform_3(%arg0: i32) -> (i32, i32, i32) {
    %c0_i32 = arith.constant 0 : i32
    %c0_i32_0 = arith.constant 0 : i32
    %c0_i32_1 = arith.constant 0 : i32
    return %arg0, %c0_i32, %c0_i32_0 : i32, i32, i32
  }
}

</mosaic_0001>

<llo_original>
// kernel: ca_layer.1
$region0: #{ca_layer.1}
  #allocation0 [shape = 'u32[]', space=smem, size = 0x4, offset = 0x4, fixed_abs, tag = 'smem constant byte address 0x4 - core index']
  #allocation1 [shape = 'u32[72,128]{1,0:T(1,128)}', space=vmem, size = 0x9000, scoped, tag = 'internal scratch']
  %s0 = inlined_call_operand.vmem [shape: f32[2,16,1024], index: 0, kind: input, shape index: {}]
  %s1 = inlined_call_operand.vmem [shape: f32[64,4], index: 1, kind: input, shape index: {}]
  %s2 = inlined_call_operand.vmem [shape: f32[4,64], index: 2, kind: input, shape index: {}]
  %s3 = inlined_call_operand.vmem [shape: f32[2,16,1024], index: 3, kind: output, shape index: {}]
  %s4 = sld [smem:[#allocation0]]
  $region22: #{ca_layer.1} parent=0
    _
  %s6 = ssub.s32 1, %s4
  %s7 = scalar_select 0, %s6, %s4
  // Predicated region
  $region2: #{ca_layer.1} parent=0 // pred_check
    _
  $region3: #{ca_layer.1} parent=0 // pred_check_branch
    %9 = sbr.rel (0) target = $region5
  $region4: #{ca_layer.1} parent=0 // pred_region
    _
  $region5: #{ca_layer.1} parent=0 // pred_fallthru
    _
  // Predicated region
  $region6: #{ca_layer.1} parent=0 // pred_check
    _
  $region7: #{ca_layer.1} parent=0 // pred_check_branch
    %11 = sbr.rel (0) target = $region9
  $region8: #{ca_layer.1} parent=0 // pred_region
    _
  $region9: #{ca_layer.1} parent=0 // pred_fallthru
    _
  // Predicated region
  $region10: #{ca_layer.1} parent=0 // pred_check
    _
  $region11: #{ca_layer.1} parent=0 // pred_check_branch
    %13 = sbr.rel (0) target = $region13
  $region12: #{ca_layer.1} parent=0 // pred_region
    _
  $region13: #{ca_layer.1} parent=0 // pred_fallthru
    _
  %v14 = vld [vmem:[%s0] sm:$0xff]
  %v15 = vld [vmem:[%s0 + $0x8] sm:$0xff]
  %v16 = vld [vmem:[%s0 + $0x10] sm:$0xff]
  %v17 = vld [vmem:[%s0 + $0x18] sm:$0xff]
  %v18 = vld [vmem:[%s0 + $0x20] sm:$0xff]
  %v19 = vld [vmem:[%s0 + $0x28] sm:$0xff]
  %v20 = vld [vmem:[%s0 + $0x30] sm:$0xff]
  %v21 = vld [vmem:[%s0 + $0x38] sm:$0xff]
  %v22 = vld [vmem:[%s0 + $0x40] sm:$0xff]
  %v23 = vld [vmem:[%s0 + $0x48] sm:$0xff]
  %v24 = vld [vmem:[%s0 + $0x50] sm:$0xff]
  %v25 = vld [vmem:[%s0 + $0x58] sm:$0xff]
  %v26 = vld [vmem:[%s0 + $0x60] sm:$0xff]
  %v27 = vld [vmem:[%s0 + $0x68] sm:$0xff]
  %v28 = vld [vmem:[%s0 + $0x70] sm:$0xff]
  %v29 = vld [vmem:[%s0 + $0x78] sm:$0xff]
  %v30 = vld [vmem:[%s0 + $0x80] sm:$0xff]
  %v31 = vld [vmem:[%s0 + $0x88] sm:$0xff]
  %v32 = vld [vmem:[%s0 + $0x90] sm:$0xff]
  %v33 = vld [vmem:[%s0 + $0x98] sm:$0xff]
  %v34 = vld [vmem:[%s0 + $0xa0] sm:$0xff]
  %v35 = vld [vmem:[%s0 + $0xa8] sm:$0xff]
  %v36 = vld [vmem:[%s0 + $0xb0] sm:$0xff]
  %v37 = vld [vmem:[%s0 + $0xb8] sm:$0xff]
  %v38 = vld [vmem:[%s0 + $0xc0] sm:$0xff]
  %v39 = vld [vmem:[%s0 + $0xc8] sm:$0xff]
  %v40 = vld [vmem:[%s0 + $0xd0] sm:$0xff]
  %v41 = vld [vmem:[%s0 + $0xd8] sm:$0xff]
  %v42 = vld [vmem:[%s0 + $0xe0] sm:$0xff]
  %v43 = vld [vmem:[%s0 + $0xe8] sm:$0xff]
  %v44 = vld [vmem:[%s0 + $0xf0] sm:$0xff]
  %v45 = vld [vmem:[%s0 + $0xf8] sm:$0xff]
  %v46 = vadd.f32 %v14, %v22
  %v47 = vrot.slane %v46, 4
  %v48 = vadd.f32 %v46, %v47
  %v49 = vrot.slane %v48, 2
  %v50 = vadd.f32 %v48, %v49
  %v51 = vrot.slane %v50, 1
  %v52 = vadd.f32 %v50, %v51
  %v53 = vadd.f32 %v15, %v23
  %v54 = vrot.slane %v53, 4
  %v55 = vadd.f32 %v53, %v54
  %v56 = vrot.slane %v55, 2
  %v57 = vadd.f32 %v55, %v56
  %v58 = vrot.slane %v57, 1
  %v59 = vadd.f32 %v57, %v58
  %v60 = vadd.f32 %v16, %v24
  %v61 = vrot.slane %v60, 4
  %v62 = vadd.f32 %v60, %v61
  %v63 = vrot.slane %v62, 2
  %v64 = vadd.f32 %v62, %v63
  %v65 = vrot.slane %v64, 1
  %v66 = vadd.f32 %v64, %v65
  %v67 = vadd.f32 %v17, %v25
  %v68 = vrot.slane %v67, 4
  %v69 = vadd.f32 %v67, %v68
  %v70 = vrot.slane %v69, 2
  %v71 = vadd.f32 %v69, %v70
  %v72 = vrot.slane %v71, 1
  %v73 = vadd.f32 %v71, %v72
  %v74 = vadd.f32 %v18, %v26
  %v75 = vrot.slane %v74, 4
  %v76 = vadd.f32 %v74, %v75
  %v77 = vrot.slane %v76, 2
  %v78 = vadd.f32 %v76, %v77
  %v79 = vrot.slane %v78, 1
  %v80 = vadd.f32 %v78, %v79
  %v81 = vadd.f32 %v19, %v27
  %v82 = vrot.slane %v81, 4
  %v83 = vadd.f32 %v81, %v82
  %v84 = vrot.slane %v83, 2
  %v85 = vadd.f32 %v83, %v84
  %v86 = vrot.slane %v85, 1
  %v87 = vadd.f32 %v85, %v86
  %v88 = vadd.f32 %v20, %v28
  %v89 = vrot.slane %v88, 4
  %v90 = vadd.f32 %v88, %v89
  %v91 = vrot.slane %v90, 2
  %v92 = vadd.f32 %v90, %v91
  %v93 = vrot.slane %v92, 1
  %v94 = vadd.f32 %v92, %v93
  %v95 = vadd.f32 %v21, %v29
  %v96 = vrot.slane %v95, 4
  %v97 = vadd.f32 %v95, %v96
  %v98 = vrot.slane %v97, 2
  %v99 = vadd.f32 %v97, %v98
  %v100 = vrot.slane %v99, 1
  %v101 = vadd.f32 %v99, %v100
  %v102 = vadd.f32 %v30, %v38
  %v103 = vrot.slane %v102, 4
  %v104 = vadd.f32 %v102, %v103
  %v105 = vrot.slane %v104, 2
  %v106 = vadd.f32 %v104, %v105
  %v107 = vrot.slane %v106, 1
  %v108 = vadd.f32 %v106, %v107
  %v109 = vadd.f32 %v31, %v39
  %v110 = vrot.slane %v109, 4
  %v111 = vadd.f32 %v109, %v110
  %v112 = vrot.slane %v111, 2
  %v113 = vadd.f32 %v111, %v112
  %v114 = vrot.slane %v113, 1
  %v115 = vadd.f32 %v113, %v114
  %v116 = vadd.f32 %v32, %v40
  %v117 = vrot.slane %v116, 4
  %v118 = vadd.f32 %v116, %v117
  %v119 = vrot.slane %v118, 2
  %v120 = vadd.f32 %v118, %v119
  %v121 = vrot.slane %v120, 1
  %v122 = vadd.f32 %v120, %v121
  %v123 = vadd.f32 %v33, %v41
  %v124 = vrot.slane %v123, 4
  %v125 = vadd.f32 %v123, %v124
  %v126 = vrot.slane %v125, 2
  %v127 = vadd.f32 %v125, %v126
  %v128 = vrot.slane %v127, 1
  %v129 = vadd.f32 %v127, %v128
  %v130 = vadd.f32 %v34, %v42
  %v131 = vrot.slane %v130, 4
  %v132 = vadd.f32 %v130, %v131
  %v133 = vrot.slane %v132, 2
  %v134 = vadd.f32 %v132, %v133
  %v135 = vrot.slane %v134, 1
  %v136 = vadd.f32 %v134, %v135
  %v137 = vadd.f32 %v35, %v43
  %v138 = vrot.slane %v137, 4
  %v139 = vadd.f32 %v137, %v138
  %v140 = vrot.slane %v139, 2
  %v141 = vadd.f32 %v139, %v140
  %v142 = vrot.slane %v141, 1
  %v143 = vadd.f32 %v141, %v142
  %v144 = vadd.f32 %v36, %v44
  %v145 = vrot.slane %v144, 4
  %v146 = vadd.f32 %v144, %v145
  %v147 = vrot.slane %v146, 2
  %v148 = vadd.f32 %v146, %v147
  %v149 = vrot.slane %v148, 1
  %v150 = vadd.f32 %v148, %v149
  %v151 = vadd.f32 %v37, %v45
  %v152 = vrot.slane %v151, 4
  %v153 = vadd.f32 %v151, %v152
  %v154 = vrot.slane %v153, 2
  %v155 = vadd.f32 %v153, %v154
  %v156 = vrot.slane %v155, 1
  %v157 = vadd.f32 %v155, %v156
  %v158 = vadd.f32 %v52, %v80
  %v159 = vadd.f32 %v59, %v87
  %v160 = vadd.f32 %v66, %v94
  %v161 = vadd.f32 %v73, %v101
  %v162 = vadd.f32 %v108, %v136
  %v163 = vadd.f32 %v115, %v143
  %v164 = vadd.f32 %v122, %v150
  %v165 = vadd.f32 %v129, %v157
  %v166 = vadd.f32 %v158, %v160
  %v167 = vadd.f32 %v159, %v161
  %v168 = vadd.f32 %v162, %v164
  %v169 = vadd.f32 %v163, %v165
  %v170 = vadd.f32 %v166, %v167
  %v171 = vadd.f32 %v168, %v169
  %174 = vrot.lane.b32.xlu0 %v170, 64
  %v175 = vpop.permute.xlu0 %174
  %176 = vrot.lane.b32.xlu0 %v171, 64
  %v177 = vpop.permute.xlu0 %176
  %v180 = vadd.f32 %v170, %v175
  %v181 = vadd.f32 %v171, %v177
  %v182 = vmul.f32 %v180, 0.00390625
  %v183 = vmul.f32 %v181, 0.00390625
  %v184 = vld [vmem:[%s1] sm:$0xff]
  %v185 = vld [vmem:[%s1 + $0x8] sm:$0xff]
  %v186 = vld [vmem:[%s1 + $0x10] sm:$0xff]
  %v187 = vld [vmem:[%s1 + $0x18] sm:$0xff]
  %v188 = vld [vmem:[%s1 + $0x20] sm:$0xff]
  %v189 = vld [vmem:[%s1 + $0x28] sm:$0xff]
  %v190 = vld [vmem:[%s1 + $0x30] sm:$0xff]
  %v191 = vld [vmem:[%s1 + $0x38] sm:$0xff]
  %v194 = vrot.slane %v183, 7
  %vm195 = vcmask 1041409
  %v196 = vsel %vm195, %v194, %v182
  %vm197 = vcmask 523264
  %v198 = vsel %vm197, %v196, 0
  %200 = vmatpush.msra.mxu0 0.0
  %201 = vmatpush.msra.mxu0 0.0
  %202 = vmatpush.msra.mxu0 0.0
  %203 = vmatpush.msra.mxu0 0.0
  %204 = vmatpush.msra.mxu0 0.0
  %205 = vmatpush.msra.mxu0 0.0
  %206 = vmatpush.msra.mxu0 0.0
  %207 = vmatpush.msra.mxu0 0.0
  %208 = vmatpush.msra.mxu0 %v191
  %209 = vmatpush.msra.mxu0 %v190
  %210 = vmatpush.msra.mxu0 %v189
  %211 = vmatpush.msra.mxu0 %v188
  %212 = vmatpush.msra.mxu0 %v187
  %213 = vmatpush.msra.mxu0 %v186
  %214 = vmatpush.msra.mxu0 %v185
  %215 = vmatpush.msra.mxu0 %v184
  %216 = vmatmul.f32.gmra.mxu0 %v198
  %v217 = vpop.f32.mrf.mxu0
  %v218 = vadd.f32 0.0, %v217
  %219 = vdwg.mxu0
  %v220 = vmax.f32 %v218, 0.0
  %v221 = vld [vmem:[%s2] sm:$0xf]
  %vm222 = vcmask 31744
  %v224 = vsel %vm222, %v220, 0
  %vm226 = vcmask 1043456
  %v228 = vsel %vm226, %v221, 0
  %230 = vmatpush.msra.mxu0 0.0
  %231 = vmatpush.msra.mxu0 0.0
  %232 = vmatpush.msra.mxu0 0.0
  %233 = vmatpush.msra.mxu0 0.0
  %234 = vmatpush.msra.mxu0 0.0
  %235 = vmatpush.msra.mxu0 0.0
  %236 = vmatpush.msra.mxu0 0.0
  %237 = vmatpush.msra.mxu0 0.0
  %238 = vmatpush.msra.mxu0 0.0
  %239 = vmatpush.msra.mxu0 0.0
  %240 = vmatpush.msra.mxu0 0.0
  %241 = vmatpush.msra.mxu0 0.0
  %242 = vmatpush.msra.mxu0 0.0
  %243 = vmatpush.msra.mxu0 0.0
  %244 = vmatpush.msra.mxu0 0.0
  %245 = vmatpush.msra.mxu0 %v228
  %246 = vmatmul.f32.gmra.mxu0 %v224
  %v247 = vpop.f32.mrf.mxu0
  %v248 = vadd.f32 0.0, %v247
  %249 = vdwg.mxu0
  %v250 = vxor.u32 %v248, 2147483648
  %v251 = vmul.f32 %v250, 1.442695
  %v252 = vpow.pop %v251
  %v253 = vadd.f32 %v252, 1.0
  %v254 = vrcp.pop %v253
  %v255 = vmul.f32 %v253, %v254
  %v256 = vsub.f32 1.0, %v255
  %v257 = vmul.f32 %v254, %v256
  %v258 = vadd.f32 %v254, %v257
  %vm259 = vweird.f32 %v253
  %vm260 = vweird.f32 %v254
  %vm261 = vmor %vm259, %vm260
  %v262 = vsel %vm261, %v254, %v258
  %v263 = vand.u32 2147483647, %v253
  %vm264 = vcmp.eq.f32.partialorder %v263, 8.507059e+37
  %v265 = vand.u32 %v253, 2147483648
  %v266 = vor.u32 1.1754944e-38, %v265
  %v267 = vsel %vm264, %v266, %v262
  %v268 = vmul.f32 1.0, %v267
  %270 = vrot.lane.b32.xlu0 %v268, 64
  %v271 = vpop.permute.xlu0 %270
  %v273 = vsel %vm197, %v268, %v271
  %v275 = vrot.slane %v273, 7
  %v276 = vrot.slane %v273, 6
  %v277 = vrot.slane %v273, 5
  %v278 = vrot.slane %v273, 4
  %v279 = vrot.slane %v273, 3
  %v280 = vrot.slane %v273, 2
  %v281 = vrot.slane %v273, 1
  %vm282 = vcmask 1040384
  %v283 = vsel %vm282, %v273, %v275
  %vm284 = vcmask 1042434
  %v285 = vsel %vm284, %v276, %v277
  %vm286 = vcmask 1041408
  %v287 = vsel %vm286, %v283, %v285
  %vm288 = vcmask 1044484
  %v289 = vsel %vm288, %v278, %v279
  %vm290 = vcmask 1046534
  %v291 = vsel %vm290, %v280, %v281
  %vm292 = vcmask 1045508
  %v293 = vsel %vm292, %v289, %v291
  %v294 = vsel %vm226, %v287, %v293
  %v295 = vsel %vm195, %v273, %v275
  %vm296 = vcmask 1043459
  %v297 = vsel %vm296, %v276, %v277
  %vm298 = vcmask 1042433
  %v299 = vsel %vm298, %v295, %v297
  %vm300 = vcmask 1045509
  %v301 = vsel %vm300, %v278, %v279
  %vm302 = vcmask 1046528
  %v303 = vsel %vm302, %v281, %v280
  %vm304 = vcmask 1046533
  %v305 = vsel %vm304, %v301, %v303
  %vm306 = vcmask 1044481
  %v307 = vsel %vm306, %v299, %v305
  %v308 = vrot.slane %v307, 1
  %v309 = vperm.slane %v294, 0
  %v310 = vperm.slane %v294, 1
  %v311 = vperm.slane %v294, 2
  %v312 = vperm.slane %v294, 3
  %v313 = vperm.slane %v294, 4
  %v314 = vperm.slane %v294, 5
  %v315 = vperm.slane %v294, 6
  %v316 = vperm.slane %v294, 7
  %v317 = vperm.slane %v308, 0
  %v318 = vperm.slane %v308, 1
  %v319 = vperm.slane %v308, 2
  %v320 = vperm.slane %v308, 3
  %v321 = vperm.slane %v308, 4
  %v322 = vperm.slane %v308, 5
  %v323 = vperm.slane %v308, 6
  %v324 = vperm.slane %v308, 7
  %v341 = vmul.f32 %v14, %v309
  %v342 = vmul.f32 %v15, %v310
  %v343 = vmul.f32 %v16, %v311
  %v344 = vmul.f32 %v17, %v312
  %v345 = vmul.f32 %v18, %v313
  %v346 = vmul.f32 %v19, %v314
  %v347 = vmul.f32 %v20, %v315
  %v348 = vmul.f32 %v21, %v316
  %v349 = vmul.f32 %v22, %v309
  %v350 = vmul.f32 %v23, %v310
  %v351 = vmul.f32 %v24, %v311
  %v352 = vmul.f32 %v25, %v312
  %v353 = vmul.f32 %v26, %v313
  %v354 = vmul.f32 %v27, %v314
  %v355 = vmul.f32 %v28, %v315
  %v356 = vmul.f32 %v29, %v316
  %v357 = vmul.f32 %v30, %v317
  %v358 = vmul.f32 %v31, %v318
  %v359 = vmul.f32 %v32, %v319
  %v360 = vmul.f32 %v33, %v320
  %v361 = vmul.f32 %v34, %v321
  %v362 = vmul.f32 %v35, %v322
  %v363 = vmul.f32 %v36, %v323
  %v364 = vmul.f32 %v37, %v324
  %v365 = vmul.f32 %v38, %v317
  %v366 = vmul.f32 %v39, %v318
  %v367 = vmul.f32 %v40, %v319
  %v368 = vmul.f32 %v41, %v320
  %v369 = vmul.f32 %v42, %v321
  %v370 = vmul.f32 %v43, %v322
  %v371 = vmul.f32 %v44, %v323
  %v372 = vmul.f32 %v45, %v324
  %373 = vst [vmem:[%s3] sm:$0xff] %v341
  %374 = vst [vmem:[%s3 + $0x8] sm:$0xff] %v342
  %375 = vst [vmem:[%s3 + $0x10] sm:$0xff] %v343
  %376 = vst [vmem:[%s3 + $0x18] sm:$0xff] %v344
  %377 = vst [vmem:[%s3 + $0x20] sm:$0xff] %v345
  %378 = vst [vmem:[%s3 + $0x28] sm:$0xff] %v346
  %379 = vst [vmem:[%s3 + $0x30] sm:$0xff] %v347
  %380 = vst [vmem:[%s3 + $0x38] sm:$0xff] %v348
  %381 = vst [vmem:[%s3 + $0x40] sm:$0xff] %v349
  %382 = vst [vmem:[%s3 + $0x48] sm:$0xff] %v350
  %383 = vst [vmem:[%s3 + $0x50] sm:$0xff] %v351
  %384 = vst [vmem:[%s3 + $0x58] sm:$0xff] %v352
  %385 = vst [vmem:[%s3 + $0x60] sm:$0xff] %v353
  %386 = vst [vmem:[%s3 + $0x68] sm:$0xff] %v354
  %387 = vst [vmem:[%s3 + $0x70] sm:$0xff] %v355
  %388 = vst [vmem:[%s3 + $0x78] sm:$0xff] %v356
  %389 = vst [vmem:[%s3 + $0x80] sm:$0xff] %v357
  %390 = vst [vmem:[%s3 + $0x88] sm:$0xff] %v358
  %391 = vst [vmem:[%s3 + $0x90] sm:$0xff] %v359
  %392 = vst [vmem:[%s3 + $0x98] sm:$0xff] %v360
  %393 = vst [vmem:[%s3 + $0xa0] sm:$0xff] %v361
  %394 = vst [vmem:[%s3 + $0xa8] sm:$0xff] %v362
  %395 = vst [vmem:[%s3 + $0xb0] sm:$0xff] %v363
  %396 = vst [vmem:[%s3 + $0xb8] sm:$0xff] %v364
  %397 = vst [vmem:[%s3 + $0xc0] sm:$0xff] %v365
  %398 = vst [vmem:[%s3 + $0xc8] sm:$0xff] %v366
  %399 = vst [vmem:[%s3 + $0xd0] sm:$0xff] %v367
  %400 = vst [vmem:[%s3 + $0xd8] sm:$0xff] %v368
  %401 = vst [vmem:[%s3 + $0xe0] sm:$0xff] %v369
  %402 = vst [vmem:[%s3 + $0xe8] sm:$0xff] %v370
  %403 = vst [vmem:[%s3 + $0xf0] sm:$0xff] %v371
  %404 = vst [vmem:[%s3 + $0xf8] sm:$0xff] %v372
  // Predicated region
  $region14: #{ca_layer.1} parent=0 // pred_check
    _
  $region15: #{ca_layer.1} parent=0 // pred_check_branch
    %406 = sbr.rel (0) target = $region17
  $region16: #{ca_layer.1} parent=0 // pred_region
    _
  $region17: #{ca_layer.1} parent=0 // pred_fallthru
    _
  // Predicated region
  $region18: #{ca_layer.1} parent=0 // pred_check
    _
  $region19: #{ca_layer.1} parent=0 // pred_check_branch
    %408 = sbr.rel (0) target = $region21
  $region20: #{ca_layer.1} parent=0 // pred_region
    _
  $region21: #{ca_layer.1} parent=0 // pred_fallthru
    _

</llo_original>
